<compile_context>
chip_gen: v6e
topology: v6e:2x2x1
jax: 0.10.0
libtpu: 0.0.40
codegen_flags: <defaults>
</compile_context>

<pallas_src>
import functools

import jax
import jax.numpy as jnp
from jax.experimental import pallas as pl
from jax.experimental.pallas import tpu as pltpu

BN_EPS = 1e-3   # facenet-pytorch uses eps=0.001 in its BatchNorm layers
PACK = 4        # images packed per 128-lane group
MAX_TM = 8192   # spatial rows per grid step (whole 160x160 image in one tile)


def _round_up(x, m):
    return (x + m - 1) // m * m


def _cdiv(a, b):
    return -(-a // b)


# --------------------------------------------------------------------------
# Fused Pallas kernel: conv(as matmul)+BN2d+ReLU -> pooled sum -> head
# --------------------------------------------------------------------------
def _disc_fused_kernel(p_ref, wconv_ref, shift2_ref, lin_ref, s1_ref, b1_ref,
                       seg_ref, o_ref, acc_ref, *, s_valid, s_pad):
    # p_ref:      [1, TM, 4*Kp]   bf16 packed im2col rows (4 images in lanes)
    # wconv_ref:  [4*Kp, 4*OC]    bf16 block-diag conv weight (BN2d scale folded)
    # shift2_ref: [1, 4*OC]       f32 packed BN2d shift
    # lin_ref:    [4*OC, 4*E]     f32 block-diag last_linear weight (no bias)
    # s1/b1_ref:  [1, 4*E]        f32 packed folded BN1d (eval)
    # seg_ref:    [4*E, 4*E]      f32 block-diag ones (per-image lane reduction)
    # o_ref:      [1, 1, 4*E]     f32 packed unit-norm embeddings
    # acc_ref:    [1, 4*OC]       f32 pooled-sum accumulator (per image group)
    m = pl.program_id(1)

    @pl.when(m == 0)
    def _():
        acc_ref[...] = jnp.zeros_like(acc_ref)

    # Conv-as-matmul for this row tile; BN2d scale folded into wconv, so the
    # epilogue is a single shift + ReLU.  Full 128-lane MXU tile.
    y = jnp.dot(p_ref[0], wconv_ref[...], preferred_element_type=jnp.float32)
    y = jnp.maximum(y + shift2_ref[...], 0.0)
    acc_ref[...] += jnp.sum(y, axis=0, keepdims=True)

    @pl.when(m == pl.num_programs(1) - 1)
    def _():
        acc = acc_ref[...]
        if s_pad != s_valid:
            # Padded zero patch rows each contributed relu(shift2) per lane;
            # subtract that constant once instead of masking every tile.
            acc = acc - float(s_pad - s_valid) * jnp.maximum(shift2_ref[...], 0.0)
        pooled = acc * (1.0 / s_valid)                                  # avg pool
        z = jnp.dot(pooled, lin_ref[...],
                    preferred_element_type=jnp.float32)                 # last_linear (4 imgs)
        z = z * s1_ref[...] + b1_ref[...]                               # BN1d (eval)
        # Per-image L2 norm: block-diag ones matmul = segmented lane reduction.
        ss = jnp.dot(z * z, seg_ref[...], preferred_element_type=jnp.float32)
        inv = jax.lax.rsqrt(jnp.maximum(ss, 1e-24))
        o_ref[0] = z * inv


# --------------------------------------------------------------------------
# Glue: im2col, parameter folding / packing, tiling, full forward
# --------------------------------------------------------------------------
def _im2col(x_nhwc, kh, kw, stride):
    B, H, W, C = x_nhwc.shape
    oh = (H - kh) // stride + 1
    ow = (W - kw) // stride + 1
    taps = []
    for i in range(kh):
        for j in range(kw):
            taps.append(x_nhwc[:, i:i + stride * (oh - 1) + 1:stride,
                               j:j + stride * (ow - 1) + 1:stride, :])
    p = jnp.stack(taps, axis=3)                     # [B, oh, ow, kh*kw, C]
    return p.reshape(B, oh * ow, kh * kw * C), oh, ow


def _fold_bn(gamma, beta, mean, var):
    scale = gamma / jnp.sqrt(var + BN_EPS)
    shift = beta - mean * scale
    return scale[None, :], shift[None, :]


def discriminator_forward(img_nchw, params):
    """Forward pass. img_nchw: [B, C, H, W] float32 (PyTorch NCHW)."""
    x = jnp.transpose(img_nchw, (0, 2, 3, 1)).astype(jnp.float32)    # -> NHWC
    B = x.shape[0]

    conv_w = params["conv_w"]                        # [OC, IC, KH, KW]
    oc, _, kh, kw = conv_w.shape

    # TODO(synk): move im2col into the kernel (tap matmuls on the NHWC input).
    patches, oh, ow = _im2col(x, kh, kw, stride=2)   # [B, S, K]
    S = oh * ow
    K = patches.shape[-1]

    # Fold BN2d (eval) scale into the conv weights; pad K so PACK*Kp == 128.
    s2, b2 = _fold_bn(params["bn2_gamma"], params["bn2_beta"],
                      params["bn2_mean"], params["bn2_var"])
    w2d = jnp.transpose(conv_w, (2, 3, 1, 0)).reshape(K, oc) * s2    # [K, OC]
    kp = _round_up(K, 128 // PACK)
    if kp != K:
        patches = jnp.pad(patches, ((0, 0), (0, 0), (0, kp - K)))
        w2d = jnp.pad(w2d, ((0, kp - K), (0, 0)))

    # Pad batch to a multiple of PACK (garbage embeddings of pad slots sliced off).
    b_pad = _round_up(max(B, 1), PACK)
    if b_pad != B:
        patches = jnp.pad(patches, ((0, b_pad - B), (0, 0), (0, 0)))
    G = b_pad // PACK

    # Spatial tiling: whole image per grid step unless S is huge.
    n_m = _cdiv(S, MAX_TM)
    tm = _round_up(_cdiv(S, n_m), 16)                # bf16 sublane multiple
    s_pad = n_m * tm
    if s_pad != S:
        patches = jnp.pad(patches, ((0, 0), (0, s_pad - S), (0, 0)))

    # 4-image lane packing: [G, s_pad, PACK*Kp] bf16 (lane index = img*Kp + k).
    p_packed = (patches.reshape(G, PACK, s_pad, kp)
                .transpose(0, 2, 1, 3)
                .reshape(G, s_pad, PACK * kp)
                .astype(jnp.bfloat16))

    eye = jnp.eye(PACK, dtype=jnp.float32)
    w_block = jnp.kron(eye, w2d).astype(jnp.bfloat16)                 # [4Kp, 4OC]
    shift2 = jnp.tile(b2, (1, PACK))                                  # [1, 4OC]

    # Head: last_linear (no bias) + folded BN1d (eval), packed across 4 images.
    lin_w = jnp.transpose(params["linear_w"])                         # [OC, E]
    E = lin_w.shape[1]
    lin_block = jnp.kron(eye, lin_w)                                  # [4OC, 4E]
    s1, b1 = _fold_bn(params["bn1_gamma"], params["bn1_beta"],
                      params["bn1_mean"], params["bn1_var"])
    s1p = jnp.tile(s1, (1, PACK))                                     # [1, 4E]
    b1p = jnp.tile(b1, (1, PACK))                                     # [1, 4E]
    seg = jnp.kron(eye, jnp.ones((E, E), jnp.float32))                # [4E, 4E]

    # VMEM budget from the actual (lane-dense) footprint, capped at the v7x
    # 32 MiB scoped limit. Tile is already 128-lane dense -> padded == nominal.
    tile_bytes = tm * PACK * kp * 2
    const_bytes = (PACK * kp) * (PACK * oc) * 2 + (PACK * oc) * (PACK * E) * 4 \
        + (PACK * E) * (PACK * E) * 4 + 3 * (PACK * E) * 4 + (PACK * oc) * 4
    vmem_budget = max(8 * 1024 * 1024,
                      min(32 * 1024 * 1024,
                          4 * tile_bytes + 2 * const_bytes + 2 * 1024 * 1024))

    kernel = functools.partial(_disc_fused_kernel, s_valid=S, s_pad=s_pad)

    out = pl.pallas_call(
        kernel,
        out_shape=jax.ShapeDtypeStruct((G, 1, PACK * E), jnp.float32),
        grid_spec=pltpu.PrefetchScalarGridSpec(
            num_scalar_prefetch=0,
            grid=(G, n_m),
            in_specs=[
                pl.BlockSpec((1, tm, PACK * kp), lambda g, m: (g, m, 0)),   # patches
                pl.BlockSpec((PACK * kp, PACK * oc), lambda g, m: (0, 0)),  # conv w
                pl.BlockSpec((1, PACK * oc), lambda g, m: (0, 0)),          # BN2d shift
                pl.BlockSpec((PACK * oc, PACK * E), lambda g, m: (0, 0)),   # last_linear
                pl.BlockSpec((1, PACK * E), lambda g, m: (0, 0)),           # BN1d scale
                pl.BlockSpec((1, PACK * E), lambda g, m: (0, 0)),           # BN1d shift
                pl.BlockSpec((PACK * E, PACK * E), lambda g, m: (0, 0)),    # seg ones
            ],
            out_specs=pl.BlockSpec((1, 1, PACK * E), lambda g, m: (g, 0, 0)),
            scratch_shapes=[pltpu.VMEM((1, PACK * oc), jnp.float32)],
        ),
        compiler_params=pltpu.CompilerParams(
            # Image-group axis is independent (megacore-parallel on v7x); the
            # pooled-sum reduction over the spatial axis stays sequential.
            dimension_semantics=("parallel", "arbitrary"),
            vmem_limit_bytes=int(vmem_budget),
        ),
    )(p_packed, w_block, shift2, lin_block, s1p, b1p, seg)

    return out.reshape(G * PACK, E)[:B]


def reference_forward(img_nchw, params):
    """Pure-JAX f32 reference for correctness checking."""
    x = jnp.transpose(img_nchw, (0, 2, 3, 1)).astype(jnp.float32)
    conv_w = params["conv_w"]
    oc = conv_w.shape[0]
    kh, kw = conv_w.shape[2], conv_w.shape[3]
    patches, oh, ow = _im2col(x, kh, kw, stride=2)                   # [B, S, K]
    w2d = jnp.transpose(conv_w, (2, 3, 1, 0)).reshape(-1, oc)
    s2, b2 = _fold_bn(params["bn2_gamma"], params["bn2_beta"],
                      params["bn2_mean"], params["bn2_var"])
    feat = jnp.maximum(patches @ w2d * s2 + b2, 0.0)                 # [B, S, OC]
    pooled = jnp.mean(feat, axis=1)
    s1, b1 = _fold_bn(params["bn1_gamma"], params["bn1_beta"],
                      params["bn1_mean"], params["bn1_var"])
    y = pooled @ jnp.transpose(params["linear_w"]) * s1 + b1
    n = jnp.sqrt(jnp.sum(y * y, axis=-1, keepdims=True))
    return y / jnp.maximum(n, 1e-12)


def init_params(key, c_in=3, c_stem=32, emb=64, k=3):
    ks = jax.random.split(key, 10)
    return {
        "conv_w": 0.1 * jax.random.normal(ks[0], (c_stem, c_in, k, k), jnp.float32),
        "bn2_gamma": 1.0 + 0.1 * jax.random.normal(ks[1], (c_stem,), jnp.float32),
        "bn2_beta": 0.1 * jax.random.normal(ks[2], (c_stem,), jnp.float32),
        "bn2_mean": 0.1 * jax.random.normal(ks[3], (c_stem,), jnp.float32),
        "bn2_var": 0.5 + jnp.abs(jax.random.normal(ks[4], (c_stem,), jnp.float32)),
        "linear_w": 0.1 * jax.random.normal(ks[5], (emb, c_stem), jnp.float32),
        "bn1_gamma": 1.0 + 0.1 * jax.random.normal(ks[6], (emb,), jnp.float32),
        "bn1_beta": 0.1 * jax.random.normal(ks[7], (emb,), jnp.float32),
        "bn1_mean": 0.1 * jax.random.normal(ks[8], (emb,), jnp.float32),
        "bn1_var": 0.5 + jnp.abs(jax.random.normal(ks[9], (emb,), jnp.float32)),
    }


if __name__ == "__main__":
    key = jax.random.PRNGKey(0)
    pkey, ikey = jax.random.split(key)
    params = init_params(pkey)

    # batch=2, channels=3 (RGB face crops), spatial=16x16 (small synthetic)
    img = jax.random.normal(ikey, (2, 3, 16, 16), jnp.float32)

    out = jax.jit(discriminator_forward)(img, params)
    out = jax.block_until_ready(out)

    ref = reference_forward(img, params)
    assert out.shape == (2, 64), out.shape
    # embeddings are L2-normalized, like InceptionResnetV1 output
    assert jnp.allclose(jnp.linalg.norm(out, axis=1), 1.0, atol=1e-3)
    # bf16 patch/weight streaming (f32 accumulation): bf16-appropriate tolerance
    cos = jnp.sum(out * ref, axis=1)
    assert jnp.all(cos > 0.995), cos
    assert jnp.allclose(out, ref, atol=3e-2), "mismatch vs JAX reference"

    print("KERNEL_OK")
</pallas_src>

<mosaic_0001>
module attributes {stable_mosaic.version = 11 : i64} {
  func.func @_disc_fused_kernel(%arg0: i32, %arg1: i32, %arg2: memref<1x64x128xbf16, #tpu.memory_space<vmem>>, %arg3: memref<128x128xbf16, #tpu.memory_space<vmem>>, %arg4: memref<1x128xf32, #tpu.memory_space<vmem>>, %arg5: memref<128x256xf32, #tpu.memory_space<vmem>>, %arg6: memref<1x256xf32, #tpu.memory_space<vmem>>, %arg7: memref<1x256xf32, #tpu.memory_space<vmem>>, %arg8: memref<256x256xf32, #tpu.memory_space<vmem>>, %arg9: memref<1x1x256xf32, #tpu.memory_space<vmem>>, %arg10: memref<1x128xf32, #tpu.memory_space<vmem>>) attributes {dimension_semantics = [#tpu.dimension_semantics<parallel>, #tpu.dimension_semantics<arbitrary>], iteration_bounds = array<i64: 1, 1>, scalar_prefetch = 0 : i64, scratch_operands = 1 : i64, tpu.core_type = #tpu.core_type<tc>, window_params = [{transform_indices = @transform_0, window_bounds = array<i64: 1, 64, 128>}, {pipeline_mode = #tpu.pipeline_mode<synchronous>, transform_indices = @transform_1, window_bounds = array<i64: 128, 128>}, {pipeline_mode = #tpu.pipeline_mode<synchronous>, transform_indices = @transform_2, window_bounds = array<i64: 1, 128>}, {pipeline_mode = #tpu.pipeline_mode<synchronous>, transform_indices = @transform_3, window_bounds = array<i64: 128, 256>}, {pipeline_mode = #tpu.pipeline_mode<synchronous>, transform_indices = @transform_4, window_bounds = array<i64: 1, 256>}, {pipeline_mode = #tpu.pipeline_mode<synchronous>, transform_indices = @transform_5, window_bounds = array<i64: 1, 256>}, {pipeline_mode = #tpu.pipeline_mode<synchronous>, transform_indices = @transform_6, window_bounds = array<i64: 256, 256>}, {transform_indices = @transform_7, window_bounds = array<i64: 1, 1, 256>}]} {
    %c0_i32 = arith.constant 0 : i32
    %0 = arith.cmpi eq, %arg1, %c0_i32 : i32
    %1 = arith.extui %0 : i1 to i32
    %c0_i32_0 = arith.constant 0 : i32
    %2 = arith.cmpi ne, %1, %c0_i32_0 : i32
    scf.if %2 {
      %cst_15 = arith.constant 0.000000e+00 : f32
      %20 = vector.broadcast %cst_15 : f32 to vector<1x128xf32>
      %c0_16 = arith.constant 0 : index
      %c0_17 = arith.constant 0 : index
      %21 = vector.load %arg10[%c0_16, %c0_17] : memref<1x128xf32, #tpu.memory_space<vmem>>, vector<1x128xf32>
      tpu.vector_store %arg10[%c0_16, %c0_17], %20 {strides = array<i32>} : memref<1x128xf32, #tpu.memory_space<vmem>>, vector<1x128xf32>,
    } else {
    }
    %c0 = arith.constant 0 : index
    %c0_1 = arith.constant 0 : index
    %c0_2 = arith.constant 0 : index
    %3 = vector.load %arg2[%c0, %c0_1, %c0_2] : memref<1x64x128xbf16, #tpu.memory_space<vmem>>, vector<1x64x128xbf16>
    %4 = vector.shape_cast %3 : vector<1x64x128xbf16> to vector<64x128xbf16>
    %c0_3 = arith.constant 0 : index
    %c0_4 = arith.constant 0 : index
    %5 = vector.load %arg3[%c0_3, %c0_4] : memref<128x128xbf16, #tpu.memory_space<vmem>>, vector<128x128xbf16>
    %cst = arith.constant dense<0.000000e+00> : vector<64x128xf32>
    %6 = tpu.matmul %4, %5, %cst {dimension_numbers = #tpu.dot_dimension_numbers<[1], [0], [0], [1], [0, 0, 1, 1], [], []>} : vector<64x128xbf16>, vector<128x128xbf16>, vector<64x128xf32> -> vector<64x128xf32>
    %c0_5 = arith.constant 0 : index
    %c0_6 = arith.constant 0 : index
    %7 = vector.load %arg4[%c0_5, %c0_6] : memref<1x128xf32, #tpu.memory_space<vmem>>, vector<1x128xf32>
    %8 = vector.broadcast %7 : vector<1x128xf32> to vector<64x128xf32>
    %9 = arith.addf %6, %8 : vector<64x128xf32>
    %cst_7 = arith.constant 0.000000e+00 : f32
    %10 = vector.broadcast %cst_7 : f32 to vector<64x128xf32>
    %11 = arith.maximumf %9, %10 : vector<64x128xf32>
    %c0_8 = arith.constant 0 : index
    %c0_9 = arith.constant 0 : index
    %12 = vector.load %arg10[%c0_8, %c0_9] : memref<1x128xf32, #tpu.memory_space<vmem>>, vector<1x128xf32>
    %cst_10 = arith.constant dense<0.000000e+00> : vector<128xf32>
    %13 = vector.multi_reduction <add>, %11, %cst_10 [0] : vector<64x128xf32> to vector<128xf32>
    %14 = vector.shape_cast %13 : vector<128xf32> to vector<1x128xf32>
    %15 = arith.addf %12, %14 : vector<1x128xf32>
    %c0_11 = arith.constant 0 : index
    %c0_12 = arith.constant 0 : index
    %16 = vector.load %arg10[%c0_11, %c0_12] : memref<1x128xf32, #tpu.memory_space<vmem>>, vector<1x128xf32>
    tpu.vector_store %arg10[%c0_11, %c0_12], %15 {strides = array<i32>} : memref<1x128xf32, #tpu.memory_space<vmem>>, vector<1x128xf32>,
    %c0_i32_13 = arith.constant 0 : i32
    %17 = arith.cmpi eq, %arg1, %c0_i32_13 : i32
    %18 = arith.extui %17 : i1 to i32
    %c0_i32_14 = arith.constant 0 : i32
    %19 = arith.cmpi ne, %18, %c0_i32_14 : i32
    scf.if %19 {
      %c0_15 = arith.constant 0 : index
      %c0_16 = arith.constant 0 : index
      %20 = vector.load %arg10[%c0_15, %c0_16] : memref<1x128xf32, #tpu.memory_space<vmem>>, vector<1x128xf32>
      %c0_17 = arith.constant 0 : index
      %c0_18 = arith.constant 0 : index
      %21 = vector.load %arg4[%c0_17, %c0_18] : memref<1x128xf32, #tpu.memory_space<vmem>>, vector<1x128xf32>
      %cst_19 = arith.constant 0.000000e+00 : f32
      %22 = vector.broadcast %cst_19 : f32 to vector<1x128xf32>
      %23 = arith.maximumf %21, %22 : vector<1x128xf32>
      %cst_20 = arith.constant 1.500000e+01 : f32
      %24 = vector.broadcast %cst_20 : f32 to vector<1x128xf32>
      %25 = arith.mulf %24, %23 : vector<1x128xf32>
      %26 = arith.subf %20, %25 : vector<1x128xf32>
      %cst_21 = arith.constant 0.0204081628 : f32
      %27 = vector.broadcast %cst_21 : f32 to vector<1x128xf32>
      %28 = arith.mulf %26, %27 : vector<1x128xf32>
      %c0_22 = arith.constant 0 : index
      %c0_23 = arith.constant 0 : index
      %29 = vector.load %arg5[%c0_22, %c0_23] : memref<128x256xf32, #tpu.memory_space<vmem>>, vector<128x256xf32>
      %cst_24 = arith.constant dense<0.000000e+00> : vector<1x256xf32>
      %30 = tpu.matmul %28, %29, %cst_24 {dimension_numbers = #tpu.dot_dimension_numbers<[1], [0], [0], [1], [0, 0, 1, 1], [], []>} : vector<1x128xf32>, vector<128x256xf32>, vector<1x256xf32> -> vector<1x256xf32>
      %c0_25 = arith.constant 0 : index
      %c0_26 = arith.constant 0 : index
      %31 = vector.load %arg6[%c0_25, %c0_26] : memref<1x256xf32, #tpu.memory_space<vmem>>, vector<1x256xf32>
      %32 = arith.mulf %30, %31 : vector<1x256xf32>
      %c0_27 = arith.constant 0 : index
      %c0_28 = arith.constant 0 : index
      %33 = vector.load %arg7[%c0_27, %c0_28] : memref<1x256xf32, #tpu.memory_space<vmem>>, vector<1x256xf32>
      %34 = arith.addf %32, %33 : vector<1x256xf32>
      %35 = arith.mulf %34, %34 : vector<1x256xf32>
      %c0_29 = arith.constant 0 : index
      %c0_30 = arith.constant 0 : index
      %36 = vector.load %arg8[%c0_29, %c0_30] : memref<256x256xf32, #tpu.memory_space<vmem>>, vector<256x256xf32>
      %cst_31 = arith.constant dense<0.000000e+00> : vector<1x256xf32>
      %37 = tpu.matmul %35, %36, %cst_31 {dimension_numbers = #tpu.dot_dimension_numbers<[1], [0], [0], [1], [0, 0, 1, 1], [], []>} : vector<1x256xf32>, vector<256x256xf32>, vector<1x256xf32> -> vector<1x256xf32>
      %cst_32 = arith.constant 1.000000e-24 : f32
      %38 = vector.broadcast %cst_32 : f32 to vector<1x256xf32>
      %39 = arith.maximumf %37, %38 : vector<1x256xf32>
      %40 = math.rsqrt %39 : vector<1x256xf32>
      %41 = arith.mulf %34, %40 : vector<1x256xf32>
      %c0_33 = arith.constant 0 : index
      %c0_34 = arith.constant 0 : index
      %c0_35 = arith.constant 0 : index
      %42 = vector.load %arg9[%c0_33, %c0_34, %c0_35] : memref<1x1x256xf32, #tpu.memory_space<vmem>>, vector<1x1x256xf32>
      %43 = vector.shape_cast %42 : vector<1x1x256xf32> to vector<1x256xf32>
      %44 = vector.shape_cast %41 : vector<1x256xf32> to vector<1x1x256xf32>
      tpu.vector_store %arg9[%c0_33, %c0_34, %c0_35], %44 {strides = array<i32>} : memref<1x1x256xf32, #tpu.memory_space<vmem>>, vector<1x1x256xf32>,
    } else {
    }
    return
  }
  func.func @transform_0(%arg0: i32, %arg1: i32) -> (i32, i32, i32) {
    %c0_i32 = arith.constant 0 : i32
    %c0_i32_0 = arith.constant 0 : i32
    return %arg0, %arg1, %c0_i32 : i32, i32, i32
  }
  func.func @transform_1(%arg0: i32, %arg1: i32) -> (i32, i32) {
    %c0_i32 = arith.constant 0 : i32
    %c0_i32_0 = arith.constant 0 : i32
    %c0_i32_1 = arith.constant 0 : i32
    return %c0_i32, %c0_i32_0 : i32, i32
  }
  func.func @transform_2(%arg0: i32, %arg1: i32) -> (i32, i32) {
    %c0_i32 = arith.constant 0 : i32
    %c0_i32_0 = arith.constant 0 : i32
    %c0_i32_1 = arith.constant 0 : i32
    return %c0_i32, %c0_i32_0 : i32, i32
  }
  func.func @transform_3(%arg0: i32, %arg1: i32) -> (i32, i32) {
    %c0_i32 = arith.constant 0 : i32
    %c0_i32_0 = arith.constant 0 : i32
    %c0_i32_1 = arith.constant 0 : i32
    return %c0_i32, %c0_i32_0 : i32, i32
  }
  func.func @transform_4(%arg0: i32, %arg1: i32) -> (i32, i32) {
    %c0_i32 = arith.constant 0 : i32
    %c0_i32_0 = arith.constant 0 : i32
    %c0_i32_1 = arith.constant 0 : i32
    return %c0_i32, %c0_i32_0 : i32, i32
  }
  func.func @transform_5(%arg0: i32, %arg1: i32) -> (i32, i32) {
    %c0_i32 = arith.constant 0 : i32
    %c0_i32_0 = arith.constant 0 : i32
    %c0_i32_1 = arith.constant 0 : i32
    return %c0_i32, %c0_i32_0 : i32, i32
  }
  func.func @transform_6(%arg0: i32, %arg1: i32) -> (i32, i32) {
    %c0_i32 = arith.constant 0 : i32
    %c0_i32_0 = arith.constant 0 : i32
    %c0_i32_1 = arith.constant 0 : i32
    return %c0_i32, %c0_i32_0 : i32, i32
  }
  func.func @transform_7(%arg0: i32, %arg1: i32) -> (i32, i32, i32) {
    %c0_i32 = arith.constant 0 : i32
    %c0_i32_0 = arith.constant 0 : i32
    %c0_i32_1 = arith.constant 0 : i32
    return %arg0, %c0_i32, %c0_i32_0 : i32, i32, i32
  }
}

</mosaic_0001>

<llo_original>
// kernel: discriminator_forward.1
$region0: #{discriminator_forward.1}
  #allocation0 [shape = 'u32[]', space=smem, size = 0x4, offset = 0x4, fixed_abs, tag = 'smem constant byte address 0x4 - core index']
  #allocation1 [shape = 'u32[144,128]{1,0:T(1,128)}', space=vmem, size = 0x12000, scoped, tag = 'internal scratch']
  #allocation2 [shape = 'f32[1,128]{1,0:T(1,128)}', space=vmem, size = 0x200, scoped, tag = 'scratch operand']
  %s0 = inlined_call_operand.vmem [shape: bf16[1,64,128], index: 0, kind: input, shape index: {}]
  %s1 = inlined_call_operand.vmem [shape: bf16[128,128], index: 1, kind: input, shape index: {}]
  %s2 = inlined_call_operand.vmem [shape: f32[1,128], index: 2, kind: input, shape index: {}]
  %s3 = inlined_call_operand.vmem [shape: f32[128,256], index: 3, kind: input, shape index: {}]
  %s4 = inlined_call_operand.vmem [shape: f32[1,256], index: 4, kind: input, shape index: {}]
  %s5 = inlined_call_operand.vmem [shape: f32[1,256], index: 5, kind: input, shape index: {}]
  %s6 = inlined_call_operand.vmem [shape: f32[256,256], index: 6, kind: input, shape index: {}]
  %s7 = inlined_call_operand.vmem [shape: f32[1,1,256], index: 7, kind: output, shape index: {}]
  %s8 = sld [smem:[#allocation0]]
  $region46: #{discriminator_forward.1} parent=0
    _
  %s10 = ssub.s32 1, %s8
  %s11 = scalar_select 0, %s10, %s8
  // Predicated region
  $region2: #{discriminator_forward.1} parent=0 // pred_check
    _
  $region3: #{discriminator_forward.1} parent=0 // pred_check_branch
    %13 = sbr.rel (0) target = $region5
  $region4: #{discriminator_forward.1} parent=0 // pred_region
    _
  $region5: #{discriminator_forward.1} parent=0 // pred_fallthru
    _
  // Predicated region
  $region6: #{discriminator_forward.1} parent=0 // pred_check
    _
  $region7: #{discriminator_forward.1} parent=0 // pred_check_branch
    %15 = sbr.rel (0) target = $region9
  $region8: #{discriminator_forward.1} parent=0 // pred_region
    _
  $region9: #{discriminator_forward.1} parent=0 // pred_fallthru
    _
  // Predicated region
  $region10: #{discriminator_forward.1} parent=0 // pred_check
    _
  $region11: #{discriminator_forward.1} parent=0 // pred_check_branch
    %17 = sbr.rel (0) target = $region13
  $region12: #{discriminator_forward.1} parent=0 // pred_region
    _
  $region13: #{discriminator_forward.1} parent=0 // pred_fallthru
    _
  // Predicated region
  $region14: #{discriminator_forward.1} parent=0 // pred_check
    _
  $region15: #{discriminator_forward.1} parent=0 // pred_check_branch
    %19 = sbr.rel (0) target = $region17
  $region16: #{discriminator_forward.1} parent=0 // pred_region
    _
  $region17: #{discriminator_forward.1} parent=0 // pred_fallthru
    _
  // Predicated region
  $region18: #{discriminator_forward.1} parent=0 // pred_check
    _
  $region19: #{discriminator_forward.1} parent=0 // pred_check_branch
    %21 = sbr.rel (0) target = $region21
  $region20: #{discriminator_forward.1} parent=0 // pred_region
    _
  $region21: #{discriminator_forward.1} parent=0 // pred_fallthru
    _
  // Predicated region
  $region22: #{discriminator_forward.1} parent=0 // pred_check
    _
  $region23: #{discriminator_forward.1} parent=0 // pred_check_branch
    %23 = sbr.rel (0) target = $region25
  $region24: #{discriminator_forward.1} parent=0 // pred_region
    _
  $region25: #{discriminator_forward.1} parent=0 // pred_fallthru
    _
  // Predicated region
  $region26: #{discriminator_forward.1} parent=0 // pred_check
    _
  $region27: #{discriminator_forward.1} parent=0 // pred_check_branch
    %25 = sbr.rel (0) target = $region29
  $region28: #{discriminator_forward.1} parent=0 // pred_region
    _
  $region29: #{discriminator_forward.1} parent=0 // pred_fallthru
    _
  %p27 = scmp.eq.s32.totalorder 0, 0
  // Predicated region
  $region30: #{discriminator_forward.1} parent=0 // pred_check
    %p28 = pneg %p27
  $region31: #{discriminator_forward.1} parent=0 // pred_check_branch
    %30 = sbr.rel (%p28) target = $region33
  $region32: #{discriminator_forward.1} parent=0 // pred_region
    %31 = vst [vmem:[#allocation2] sm:$0x1] 0.0
  $region33: #{discriminator_forward.1} parent=0 // pred_fallthru
    _
  %v32 = vld [vmem:[%s0] sm:$0xf]
  %v33 = vld [vmem:[%s0 + $0x4] sm:$0xf]
  %v34 = vld [vmem:[%s0 + $0x8] sm:$0xf]
  %v35 = vld [vmem:[%s0 + $0xc] sm:$0xf]
  %v36 = vld [vmem:[%s0 + $0x10] sm:$0xf]
  %v37 = vld [vmem:[%s0 + $0x14] sm:$0xf]
  %v38 = vld [vmem:[%s0 + $0x18] sm:$0xf]
  %v39 = vld [vmem:[%s0 + $0x1c] sm:$0xf]
  %v40 = vld [vmem:[%s1] sm:$0xf]
  %v41 = vld [vmem:[%s1 + $0x4] sm:$0xf]
  %v42 = vld [vmem:[%s1 + $0x8] sm:$0xf]
  %v43 = vld [vmem:[%s1 + $0xc] sm:$0xf]
  %v44 = vld [vmem:[%s1 + $0x10] sm:$0xf]
  %v45 = vld [vmem:[%s1 + $0x14] sm:$0xf]
  %v46 = vld [vmem:[%s1 + $0x18] sm:$0xf]
  %v47 = vld [vmem:[%s1 + $0x1c] sm:$0xf]
  %v48 = vld [vmem:[%s1 + $0x20] sm:$0xf]
  %v49 = vld [vmem:[%s1 + $0x24] sm:$0xf]
  %v50 = vld [vmem:[%s1 + $0x28] sm:$0xf]
  %v51 = vld [vmem:[%s1 + $0x2c] sm:$0xf]
  %v52 = vld [vmem:[%s1 + $0x30] sm:$0xf]
  %v53 = vld [vmem:[%s1 + $0x34] sm:$0xf]
  %v54 = vld [vmem:[%s1 + $0x38] sm:$0xf]
  %v55 = vld [vmem:[%s1 + $0x3c] sm:$0xf]
  %v56 = vld [vmem:[%s2] sm:$0x1]
  %v58 = vlaneseq
  %v59 = vshrl.u32 %v58, 7
  %v60 = vsub.s32 0, %v59
  %v61 = vrot.slane %v56, %v60
  %v71 = vunpack.c.l.b16 %v32
  %v72 = vunpack.c.l.b16 %v33
  %v73 = vunpack.c.l.b16 %v34
  %v74 = vunpack.c.l.b16 %v35
  %v75 = vunpack.c.l.b16 %v36
  %v76 = vunpack.c.l.b16 %v37
  %v77 = vunpack.c.l.b16 %v38
  %v78 = vunpack.c.l.b16 %v39
  %v79 = vpack.c.b16 %v72, %v71
  %v80 = vpack.c.b16 %v74, %v73
  %v81 = vpack.c.b16 %v76, %v75
  %v82 = vpack.c.b16 %v78, %v77
  %v103 = vunpack.c.l.b16 %v40
  %v104 = vunpack.c.l.b16 %v41
  %v105 = vunpack.c.l.b16 %v42
  %v106 = vunpack.c.l.b16 %v43
  %v107 = vunpack.c.l.b16 %v44
  %v108 = vunpack.c.l.b16 %v45
  %v109 = vunpack.c.l.b16 %v46
  %v110 = vunpack.c.l.b16 %v47
  %v111 = vunpack.c.l.b16 %v48
  %v112 = vunpack.c.l.b16 %v49
  %v113 = vunpack.c.l.b16 %v50
  %v114 = vunpack.c.l.b16 %v51
  %v115 = vunpack.c.l.b16 %v52
  %v116 = vunpack.c.l.b16 %v53
  %v117 = vunpack.c.l.b16 %v54
  %v118 = vunpack.c.l.b16 %v55
  %v119 = vpack.c.b16 %v104, %v103
  %v120 = vpack.c.b16 %v106, %v105
  %v121 = vpack.c.b16 %v108, %v107
  %v122 = vpack.c.b16 %v110, %v109
  %v123 = vpack.c.b16 %v112, %v111
  %v124 = vpack.c.b16 %v114, %v113
  %v125 = vpack.c.b16 %v116, %v115
  %v126 = vpack.c.b16 %v118, %v117
  %135 = vmatprep.subr.bf16.mxu0 0
  %136 = vmatpush1.bf16.msra.mxu0 %v126
  %137 = vmatprep.subr.bf16.mxu0 0
  %138 = vmatpush1.bf16.msra.mxu0 %v125
  %139 = vmatprep.subr.bf16.mxu0 0
  %140 = vmatpush1.bf16.msra.mxu0 %v124
  %141 = vmatprep.subr.bf16.mxu0 0
  %142 = vmatpush1.bf16.msra.mxu0 %v123
  %143 = vmatprep.subr.bf16.mxu0 0
  %144 = vmatpush1.bf16.msra.mxu0 %v122
  %145 = vmatprep.subr.bf16.mxu0 0
  %146 = vmatpush1.bf16.msra.mxu0 %v121
  %147 = vmatprep.subr.bf16.mxu0 0
  %148 = vmatpush1.bf16.msra.mxu0 %v120
  %149 = vmatprep.subr.bf16.mxu0 0
  %150 = vmatpush1.bf16.msra.mxu0 %v119
  %151 = vmatprep.subr.bf16.mxu0 0
  %152 = vmatpush2.bf16.msra.mxu0 0
  %153 = vmatprep.subr.bf16.mxu0 0
  %154 = vmatpush2.bf16.msra.mxu0 0
  %155 = vmatprep.subr.bf16.mxu0 0
  %156 = vmatpush2.bf16.msra.mxu0 0
  %157 = vmatprep.subr.bf16.mxu0 0
  %158 = vmatpush2.bf16.msra.mxu0 0
  %159 = vmatprep.subr.bf16.mxu0 0
  %160 = vmatpush2.bf16.msra.mxu0 0
  %161 = vmatprep.subr.bf16.mxu0 0
  %162 = vmatpush2.bf16.msra.mxu0 0
  %163 = vmatprep.subr.bf16.mxu0 0
  %164 = vmatpush2.bf16.msra.mxu0 0
  %165 = vmatprep.subr.bf16.mxu0 0
  %166 = vmatpush2.bf16.msra.mxu0 0
  %167 = vmatprep.mubr.bf16.mxu0 0
  %168 = vmatmul.mubr.bf16.gmra.mxu0 %v79
  %v169 = vpop.f32.mrf.mxu0
  %v170 = vadd.f32 %v61, %v169
  %v171 = vpop.f32.mrf.mxu0
  %v172 = vpop.f32.mrf.mxu0
  %v173 = vadd.f32 %v61, %v172
  %v174 = vpop.f32.mrf.mxu0
  %175 = vmatprep.mubr.bf16.mxu0 0
  %176 = vmatmul.mubr.bf16.gmra.mxu0 %v80
  %v177 = vpop.f32.mrf.mxu0
  %v178 = vadd.f32 %v61, %v177
  %v179 = vpop.f32.mrf.mxu0
  %v180 = vpop.f32.mrf.mxu0
  %v181 = vadd.f32 %v61, %v180
  %v182 = vpop.f32.mrf.mxu0
  %183 = vmatprep.mubr.bf16.mxu0 0
  %184 = vmatmul.mubr.bf16.gmra.mxu0 %v81
  %v185 = vpop.f32.mrf.mxu0
  %v186 = vadd.f32 %v61, %v185
  %v187 = vpop.f32.mrf.mxu0
  %v188 = vpop.f32.mrf.mxu0
  %v189 = vadd.f32 %v61, %v188
  %v190 = vpop.f32.mrf.mxu0
  %191 = vmatprep.mubr.bf16.mxu0 0
  %192 = vmatmul.mubr.bf16.gmra.mxu0 %v82
  %v193 = vpop.f32.mrf.mxu0
  %v194 = vadd.f32 %v61, %v193
  %v195 = vpop.f32.mrf.mxu0
  %v196 = vpop.f32.mrf.mxu0
  %v197 = vadd.f32 %v61, %v196
  %v198 = vpop.f32.mrf.mxu0
  %199 = vdwg.mxu0
  %v200 = vmax.f32 %v170, 0.0
  %v201 = vmax.f32 %v173, 0.0
  %v202 = vmax.f32 %v178, 0.0
  %v203 = vmax.f32 %v181, 0.0
  %v204 = vmax.f32 %v186, 0.0
  %v205 = vmax.f32 %v189, 0.0
  %v206 = vmax.f32 %v194, 0.0
  %v207 = vmax.f32 %v197, 0.0
  %v208 = vld [vmem:[#allocation2] sm:$0x1]
  %v209 = vadd.f32 %v200, %v201
  %v210 = vadd.f32 %v209, %v202
  %v211 = vadd.f32 %v210, %v203
  %v212 = vadd.f32 %v211, %v204
  %v213 = vadd.f32 %v212, %v205
  %v214 = vadd.f32 %v213, %v206
  %v215 = vadd.f32 %v214, %v207
  %v216 = vrot.slane %v215, 4
  %v217 = vadd.f32 %v215, %v216
  %v218 = vrot.slane %v217, 2
  %v219 = vadd.f32 %v217, %v218
  %v220 = vrot.slane %v219, 1
  %v221 = vadd.f32 %v219, %v220
  %v222 = vadd.f32 %v208, %v221
  %223 = vst [vmem:[#allocation2] sm:$0x1] %v222
  // Predicated region
  $region34: #{discriminator_forward.1} parent=0 // pred_check
    %p224 = pneg %p27
  $region35: #{discriminator_forward.1} parent=0 // pred_check_branch
    %226 = sbr.rel (%p224) target = $region37
  $region36: #{discriminator_forward.1} parent=0 // pred_region
    %v227 = vld [vmem:[#allocation2] sm:$0x1]
    %v228 = vld [vmem:[%s2] sm:$0x1]
    %v229 = vmax.f32 %v228, 0.0
    %v230 = vmul.f32 %v229, 15.0
    %v231 = vsub.f32 %v227, %v230
    %v232 = vmul.f32 %v231, 0.020408163
    %v233 = vld [vmem:[%s3] sm:$0xff]
    %v234 = vld [vmem:[%s3 + $0x8] sm:$0xff]
    %v235 = vld [vmem:[%s3 + $0x10] sm:$0xff]
    %v236 = vld [vmem:[%s3 + $0x18] sm:$0xff]
    %v237 = vld [vmem:[%s3 + $0x20] sm:$0xff]
    %v238 = vld [vmem:[%s3 + $0x28] sm:$0xff]
    %v239 = vld [vmem:[%s3 + $0x30] sm:$0xff]
    %v240 = vld [vmem:[%s3 + $0x38] sm:$0xff]
    %v241 = vld [vmem:[%s3 + $0x40] sm:$0xff]
    %v242 = vld [vmem:[%s3 + $0x48] sm:$0xff]
    %v243 = vld [vmem:[%s3 + $0x50] sm:$0xff]
    %v244 = vld [vmem:[%s3 + $0x58] sm:$0xff]
    %v245 = vld [vmem:[%s3 + $0x60] sm:$0xff]
    %v246 = vld [vmem:[%s3 + $0x68] sm:$0xff]
    %v247 = vld [vmem:[%s3 + $0x70] sm:$0xff]
    %v248 = vld [vmem:[%s3 + $0x78] sm:$0xff]
    %v249 = vld [vmem:[%s3 + $0x80] sm:$0xff]
    %v250 = vld [vmem:[%s3 + $0x88] sm:$0xff]
    %v251 = vld [vmem:[%s3 + $0x90] sm:$0xff]
    %v252 = vld [vmem:[%s3 + $0x98] sm:$0xff]
    %v253 = vld [vmem:[%s3 + $0xa0] sm:$0xff]
    %v254 = vld [vmem:[%s3 + $0xa8] sm:$0xff]
    %v255 = vld [vmem:[%s3 + $0xb0] sm:$0xff]
    %v256 = vld [vmem:[%s3 + $0xb8] sm:$0xff]
    %v257 = vld [vmem:[%s3 + $0xc0] sm:$0xff]
    %v258 = vld [vmem:[%s3 + $0xc8] sm:$0xff]
    %v259 = vld [vmem:[%s3 + $0xd0] sm:$0xff]
    %v260 = vld [vmem:[%s3 + $0xd8] sm:$0xff]
    %v261 = vld [vmem:[%s3 + $0xe0] sm:$0xff]
    %v262 = vld [vmem:[%s3 + $0xe8] sm:$0xff]
    %v263 = vld [vmem:[%s3 + $0xf0] sm:$0xff]
    %v264 = vld [vmem:[%s3 + $0xf8] sm:$0xff]
    %265 = vmatprep.subr.mxu0 %v264
    %266 = vmatpush1.msra.mxu0 %v263
    %267 = vmatprep.subr.mxu0 %v262
    %268 = vmatpush1.msra.mxu0 %v261
    %269 = vmatprep.subr.mxu0 %v260
    %270 = vmatpush1.msra.mxu0 %v259
    %271 = vmatprep.subr.mxu0 %v258
    %272 = vmatpush1.msra.mxu0 %v257
    %273 = vmatprep.subr.mxu0 %v256
    %274 = vmatpush1.msra.mxu0 %v255
    %275 = vmatprep.subr.mxu0 %v254
    %276 = vmatpush1.msra.mxu0 %v253
    %277 = vmatprep.subr.mxu0 %v252
    %278 = vmatpush1.msra.mxu0 %v251
    %279 = vmatprep.subr.mxu0 %v250
    %280 = vmatpush1.msra.mxu0 %v249
    %281 = vmatprep.subr.mxu0 %v248
    %282 = vmatpush1.msra.mxu0 %v247
    %283 = vmatprep.subr.mxu0 %v246
    %284 = vmatpush1.msra.mxu0 %v245
    %285 = vmatprep.subr.mxu0 %v244
    %286 = vmatpush1.msra.mxu0 %v243
    %287 = vmatprep.subr.mxu0 %v242
    %288 = vmatpush1.msra.mxu0 %v241
    %289 = vmatprep.subr.mxu0 %v240
    %290 = vmatpush1.msra.mxu0 %v239
    %291 = vmatprep.subr.mxu0 %v238
    %292 = vmatpush1.msra.mxu0 %v237
    %293 = vmatprep.subr.mxu0 %v236
    %294 = vmatpush1.msra.mxu0 %v235
    %295 = vmatprep.subr.mxu0 %v234
    %296 = vmatpush1.msra.mxu0 %v233
    %297 = vmatprep.subr.mxu0 0.0
    %298 = vmatpush2.msra.mxu0 0.0
    %299 = vmatprep.subr.mxu0 0.0
    %300 = vmatpush2.msra.mxu0 0.0
    %301 = vmatprep.subr.mxu0 0.0
    %302 = vmatpush2.msra.mxu0 0.0
    %303 = vmatprep.subr.mxu0 0.0
    %304 = vmatpush2.msra.mxu0 0.0
    %305 = vmatprep.subr.mxu0 0.0
    %306 = vmatpush2.msra.mxu0 0.0
    %307 = vmatprep.subr.mxu0 0.0
    %308 = vmatpush2.msra.mxu0 0.0
    %309 = vmatprep.subr.mxu0 0.0
    %310 = vmatpush2.msra.mxu0 0.0
    %311 = vmatprep.subr.mxu0 0.0
    %312 = vmatpush2.msra.mxu0 0.0
    %313 = vmatprep.subr.mxu0 0.0
    %314 = vmatpush2.msra.mxu0 0.0
    %315 = vmatprep.subr.mxu0 0.0
    %316 = vmatpush2.msra.mxu0 0.0
    %317 = vmatprep.subr.mxu0 0.0
    %318 = vmatpush2.msra.mxu0 0.0
    %319 = vmatprep.subr.mxu0 0.0
    %320 = vmatpush2.msra.mxu0 0.0
    %321 = vmatprep.subr.mxu0 0.0
    %322 = vmatpush2.msra.mxu0 0.0
    %323 = vmatprep.subr.mxu0 0.0
    %324 = vmatpush2.msra.mxu0 0.0
    %325 = vmatprep.subr.mxu0 0.0
    %326 = vmatpush2.msra.mxu0 0.0
    %327 = vmatprep.subr.mxu0 0.0
    %328 = vmatpush2.msra.mxu0 0.0
    %329 = vmatprep.mubr.f32.mxu0 0.0
    %330 = vmatmul.mubr.f32.gmra.mxu0 %v232
    %v331 = vpop.f32.mrf.mxu0
    %v332 = vadd.f32 0.0, %v331
    %v333 = vpop.f32.mrf.mxu0
    %v334 = vadd.f32 0.0, %v333
    %335 = vdwg.mxu0
    %v336 = vld [vmem:[%s4] sm:$0x3]
    %v338 = vlaneseq
    %v339 = vshrl.u32 %v338, 7
    %v340 = vsub.s32 0, %v339
    %v341 = vrot.slane %v336, %v340
    %v342 = vlaneseq
    %v343 = vshrl.u32 %v342, 7
    %v344 = vsub.s32 1, %v343
    %v345 = vrot.slane %v336, %v344
    %v348 = vmul.f32 %v332, %v341
    %v349 = vmul.f32 %v334, %v345
    %v350 = vld [vmem:[%s5] sm:$0x3]
    %v352 = vlaneseq
    %v353 = vshrl.u32 %v352, 7
    %v354 = vsub.s32 0, %v353
    %v355 = vrot.slane %v350, %v354
    %v356 = vlaneseq
    %v357 = vshrl.u32 %v356, 7
    %v358 = vsub.s32 1, %v357
    %v359 = vrot.slane %v350, %v358
    %v362 = vadd.f32 %v348, %v355
    %v363 = vadd.f32 %v349, %v359
    %v364 = vmul.f32 %v362, %v362
    %v365 = vmul.f32 %v363, %v363
    %v366 = vld [vmem:[%s6] sm:$0xff]
    %v367 = vld [vmem:[%s6 + $0x8] sm:$0xff]
    %v368 = vld [vmem:[%s6 + $0x10] sm:$0xff]
    %v369 = vld [vmem:[%s6 + $0x18] sm:$0xff]
    %v370 = vld [vmem:[%s6 + $0x20] sm:$0xff]
    %v371 = vld [vmem:[%s6 + $0x28] sm:$0xff]
    %v372 = vld [vmem:[%s6 + $0x30] sm:$0xff]
    %v373 = vld [vmem:[%s6 + $0x38] sm:$0xff]
    %v374 = vld [vmem:[%s6 + $0x40] sm:$0xff]
    %v375 = vld [vmem:[%s6 + $0x48] sm:$0xff]
    %v376 = vld [vmem:[%s6 + $0x50] sm:$0xff]
    %v377 = vld [vmem:[%s6 + $0x58] sm:$0xff]
    %v378 = vld [vmem:[%s6 + $0x60] sm:$0xff]
    %v379 = vld [vmem:[%s6 + $0x68] sm:$0xff]
    %v380 = vld [vmem:[%s6 + $0x70] sm:$0xff]
    %v381 = vld [vmem:[%s6 + $0x78] sm:$0xff]
    %v382 = vld [vmem:[%s6 + $0x80] sm:$0xff]
    %v383 = vld [vmem:[%s6 + $0x88] sm:$0xff]
    %v384 = vld [vmem:[%s6 + $0x90] sm:$0xff]
    %v385 = vld [vmem:[%s6 + $0x98] sm:$0xff]
    %v386 = vld [vmem:[%s6 + $0xa0] sm:$0xff]
    %v387 = vld [vmem:[%s6 + $0xa8] sm:$0xff]
    %v388 = vld [vmem:[%s6 + $0xb0] sm:$0xff]
    %v389 = vld [vmem:[%s6 + $0xb8] sm:$0xff]
    %v390 = vld [vmem:[%s6 + $0xc0] sm:$0xff]
    %v391 = vld [vmem:[%s6 + $0xc8] sm:$0xff]
    %v392 = vld [vmem:[%s6 + $0xd0] sm:$0xff]
    %v393 = vld [vmem:[%s6 + $0xd8] sm:$0xff]
    %v394 = vld [vmem:[%s6 + $0xe0] sm:$0xff]
    %v395 = vld [vmem:[%s6 + $0xe8] sm:$0xff]
    %v396 = vld [vmem:[%s6 + $0xf0] sm:$0xff]
    %v397 = vld [vmem:[%s6 + $0xf8] sm:$0xff]
    %v398 = vld [vmem:[%s6 + $0x100] sm:$0xff]
    %v399 = vld [vmem:[%s6 + $0x108] sm:$0xff]
    %v400 = vld [vmem:[%s6 + $0x110] sm:$0xff]
    %v401 = vld [vmem:[%s6 + $0x118] sm:$0xff]
    %v402 = vld [vmem:[%s6 + $0x120] sm:$0xff]
    %v403 = vld [vmem:[%s6 + $0x128] sm:$0xff]
    %v404 = vld [vmem:[%s6 + $0x130] sm:$0xff]
    %v405 = vld [vmem:[%s6 + $0x138] sm:$0xff]
    %v406 = vld [vmem:[%s6 + $0x140] sm:$0xff]
    %v407 = vld [vmem:[%s6 + $0x148] sm:$0xff]
    %v408 = vld [vmem:[%s6 + $0x150] sm:$0xff]
    %v409 = vld [vmem:[%s6 + $0x158] sm:$0xff]
    %v410 = vld [vmem:[%s6 + $0x160] sm:$0xff]
    %v411 = vld [vmem:[%s6 + $0x168] sm:$0xff]
    %v412 = vld [vmem:[%s6 + $0x170] sm:$0xff]
    %v413 = vld [vmem:[%s6 + $0x178] sm:$0xff]
    %v414 = vld [vmem:[%s6 + $0x180] sm:$0xff]
    %v415 = vld [vmem:[%s6 + $0x188] sm:$0xff]
    %v416 = vld [vmem:[%s6 + $0x190] sm:$0xff]
    %v417 = vld [vmem:[%s6 + $0x198] sm:$0xff]
    %v418 = vld [vmem:[%s6 + $0x1a0] sm:$0xff]
    %v419 = vld [vmem:[%s6 + $0x1a8] sm:$0xff]
    %v420 = vld [vmem:[%s6 + $0x1b0] sm:$0xff]
    %v421 = vld [vmem:[%s6 + $0x1b8] sm:$0xff]
    %v422 = vld [vmem:[%s6 + $0x1c0] sm:$0xff]
    %v423 = vld [vmem:[%s6 + $0x1c8] sm:$0xff]
    %v424 = vld [vmem:[%s6 + $0x1d0] sm:$0xff]
    %v425 = vld [vmem:[%s6 + $0x1d8] sm:$0xff]
    %v426 = vld [vmem:[%s6 + $0x1e0] sm:$0xff]
    %v427 = vld [vmem:[%s6 + $0x1e8] sm:$0xff]
    %v428 = vld [vmem:[%s6 + $0x1f0] sm:$0xff]
    %v429 = vld [vmem:[%s6 + $0x1f8] sm:$0xff]
    %430 = vmatprep.subr.mxu0 %v397
    %431 = vmatpush1.msra.mxu0 %v396
    %432 = vmatprep.subr.mxu0 %v395
    %433 = vmatpush1.msra.mxu0 %v394
    %434 = vmatprep.subr.mxu0 %v393
    %435 = vmatpush1.msra.mxu0 %v392
    %436 = vmatprep.subr.mxu0 %v391
    %437 = vmatpush1.msra.mxu0 %v390
    %438 = vmatprep.subr.mxu0 %v389
    %439 = vmatpush1.msra.mxu0 %v388
    %440 = vmatprep.subr.mxu0 %v387
    %441 = vmatpush1.msra.mxu0 %v386
    %442 = vmatprep.subr.mxu0 %v385
    %443 = vmatpush1.msra.mxu0 %v384
    %444 = vmatprep.subr.mxu0 %v383
    %445 = vmatpush1.msra.mxu0 %v382
    %446 = vmatprep.subr.mxu0 %v381
    %447 = vmatpush1.msra.mxu0 %v380
    %448 = vmatprep.subr.mxu0 %v379
    %449 = vmatpush1.msra.mxu0 %v378
    %450 = vmatprep.subr.mxu0 %v377
    %451 = vmatpush1.msra.mxu0 %v376
    %452 = vmatprep.subr.mxu0 %v375
    %453 = vmatpush1.msra.mxu0 %v374
    %454 = vmatprep.subr.mxu0 %v373
    %455 = vmatpush1.msra.mxu0 %v372
    %456 = vmatprep.subr.mxu0 %v371
    %457 = vmatpush1.msra.mxu0 %v370
    %458 = vmatprep.subr.mxu0 %v369
    %459 = vmatpush1.msra.mxu0 %v368
    %460 = vmatprep.subr.mxu0 %v367
    %461 = vmatpush1.msra.mxu0 %v366
    %462 = vmatprep.subr.mxu0 %v429
    %463 = vmatpush2.msra.mxu0 %v428
    %464 = vmatprep.subr.mxu0 %v427
    %465 = vmatpush2.msra.mxu0 %v426
    %466 = vmatprep.subr.mxu0 %v425
    %467 = vmatpush2.msra.mxu0 %v424
    %468 = vmatprep.subr.mxu0 %v423
    %469 = vmatpush2.msra.mxu0 %v422
    %470 = vmatprep.subr.mxu0 %v421
    %471 = vmatpush2.msra.mxu0 %v420
    %472 = vmatprep.subr.mxu0 %v419
    %473 = vmatpush2.msra.mxu0 %v418
    %474 = vmatprep.subr.mxu0 %v417
    %475 = vmatpush2.msra.mxu0 %v416
    %476 = vmatprep.subr.mxu0 %v415
    %477 = vmatpush2.msra.mxu0 %v414
    %478 = vmatprep.subr.mxu0 %v413
    %479 = vmatpush2.msra.mxu0 %v412
    %480 = vmatprep.subr.mxu0 %v411
    %481 = vmatpush2.msra.mxu0 %v410
    %482 = vmatprep.subr.mxu0 %v409
    %483 = vmatpush2.msra.mxu0 %v408
    %484 = vmatprep.subr.mxu0 %v407
    %485 = vmatpush2.msra.mxu0 %v406
    %486 = vmatprep.subr.mxu0 %v405
    %487 = vmatpush2.msra.mxu0 %v404
    %488 = vmatprep.subr.mxu0 %v403
    %489 = vmatpush2.msra.mxu0 %v402
    %490 = vmatprep.subr.mxu0 %v401
    %491 = vmatpush2.msra.mxu0 %v400
    %492 = vmatprep.subr.mxu0 %v399
    %493 = vmatpush2.msra.mxu0 %v398
    %494 = vmatprep.mubr.f32.mxu0 %v365
    %495 = vmatmul.mubr.f32.gmra.mxu0 %v364
    %v496 = vpop.f32.mrf.mxu0
    %v497 = vadd.f32 0.0, %v496
    %v498 = vpop.f32.mrf.mxu0
    %v499 = vadd.f32 0.0, %v498
    %500 = vdwg.mxu0
    %v501 = vmax.f32 %v497, 1e-24
    %v502 = vmax.f32 %v499, 1e-24
    %v503 = vrsqrt.pop %v501
    %v504 = vrsqrt.pop %v502
    %v505 = vmul.f32 %v362, %v503
    %v506 = vmul.f32 %v363, %v504
    %v509 = vcombine.low %v505, %v506
    %v511 = vunpack.c.l.s4 1966171168
    %v512 = vunpack.c.0.s8 %v511
    %v513 = vlaneseq
    %v514 = vshrl.u32 %v513, 7
    %v515 = vsub.s32 %v512, %v514
    %v516 = vrot.slane %v509, %v515
    %v518 = vunpack.c.l.s4 1966171168
    %v519 = vunpack.c.0.s8 %v518
    %v520 = vlaneseq
    %v521 = vshrl.u32 %v520, 7
    %v522 = vsub.s32 %v519, %v521
    %v523 = vrot.slane %v516, %v522
    %v525 = vlaneseq
    %vm526 = vcmp.ge.s32.totalorder %v525, 0
    %vm527 = vcmp.lt.s32.totalorder %v525, 256
    %vm528 = vmand %vm526, %vm527
    %529 = vst.msk [vmem:[%s7] sm:$0x3] %vm528, %v523
  $region37: #{discriminator_forward.1} parent=0 // pred_fallthru
    _
  // Predicated region
  $region38: #{discriminator_forward.1} parent=0 // pred_check
    _
  $region39: #{discriminator_forward.1} parent=0 // pred_check_branch
    %531 = sbr.rel (0) target = $region41
  $region40: #{discriminator_forward.1} parent=0 // pred_region
    _
  $region41: #{discriminator_forward.1} parent=0 // pred_fallthru
    _
  // Predicated region
  $region42: #{discriminator_forward.1} parent=0 // pred_check
    _
  $region43: #{discriminator_forward.1} parent=0 // pred_check_branch
    %533 = sbr.rel (0) target = $region45
  $region44: #{discriminator_forward.1} parent=0 // pred_region
    _
  $region45: #{discriminator_forward.1} parent=0 // pred_fallthru
    _

</llo_original>
